<compile_context>
chip_gen: v5e
topology: v5e:2x2
jax: 0.10.0
libtpu: 0.0.40
codegen_flags: <defaults>
</compile_context>

<pallas_src>
import jax
import jax.numpy as jnp
from jax.experimental import pallas as pl
from jax.experimental.pallas import tpu as pltpu


def _round_up(a, m):
    return (a + m - 1) // m * m


def _sft_kernel(x_ref, r_ref, w1_ref, w2_ref, o_ref):
    # x_ref:  (B_blk, C_out, T)      tile of x (spatial on lanes)
    # r_ref:  (B_blk, C_in,  T)      tile of repr
    # w1_ref: (2*C_out, C_in)        fused first-layer weights [gamma1; beta1]
    # w2_ref: (2*C_out, 2*C_out)     block-diagonal second-layer weights
    # o_ref:  (B_blk, C_out, T)
    co = o_ref.shape[1]
    w1 = w1_ref[...]
    w2 = w2_ref[...]
    for bi in range(x_ref.shape[0]):                       # static unroll (small)
        r = r_ref[bi]                                       # (C_in, T)
        h = jnp.maximum(
            jnp.dot(w1, r, preferred_element_type=jnp.float32), 0.0)
        gb = jnp.dot(w2, h, preferred_element_type=jnp.float32)  # (2*C_out, T)
        x = x_ref[bi].astype(jnp.float32)
        o_ref[bi] = (x * gb[:co, :] + gb[co:, :]).astype(o_ref.dtype)


def sft_layer(x, repr_, wg1, wg2, wb1, wb2, *, max_tile=16384):
    """x: (B, C_out, H, W); repr_: (B, C_in, H, W); weights are PyTorch-layout
    Conv2d 1x1 weights with the trailing (1,1) dims squeezed: (out, in)."""
    B, C_out, H, W = x.shape
    C_in = repr_.shape[1]
    HW = H * W
    itemsize = jnp.dtype(x.dtype).itemsize

    # NCHW -> (B, C, H*W): a pure reshape, no data movement, no padding.
    x3 = x.reshape(B, C_out, HW)
    r3 = repr_.reshape(B, C_in, HW)

    # Fused weights: one (2*C_out, C_in) first layer, block-diag second layer.
    w1 = jnp.concatenate([wg1, wb1], axis=0)                       # (2Co, Ci)
    z = jnp.zeros((C_out, C_out), dtype=wg2.dtype)
    w2 = jnp.concatenate(
        [jnp.concatenate([wg2, z], axis=1),
         jnp.concatenate([z, wb2], axis=1)], axis=0)               # (2Co, 2Co)

    # --- tile sizing from a VMEM byte budget (works on v5e/v6e/v7x) ----------
    per_col_bytes = (C_in + 2 * C_out) * itemsize    # x + repr + out per column
    step_budget = 4 * 1024 * 1024                    # streamed bytes per grid step
    max_cols = max(128, (step_budget // max(per_col_bytes, 1)) // 128 * 128)
    tile_n = int(min(_round_up(HW, 128), max_cols, max_tile))
    hw_tiles = pl.cdiv(HW, tile_n)

    # Batch blocking when a single spatial tile covers HW, so each grid step
    # still moves a reasonable payload (amortizes the fixed per-step cost).
    b_blk = 1
    if hw_tiles == 1:
        per_step_bytes = tile_n * per_col_bytes
        target = 512 * 1024
        b_blk = max(1, min(B,
                           target // max(per_step_bytes, 1),
                           step_budget // max(per_step_bytes, 1),
                           8))
        if b_blk >= B and B >= 2:
            b_blk = (B + 1) // 2     # keep >= 2 grid steps for v7x's 2 TCs
    b_tiles = pl.cdiv(B, b_blk)
    grid = (b_tiles, hw_tiles)

    # VMEM estimate: double-buffered I/O + resident weights + f32 intermediates.
    io_step = b_blk * tile_n * per_col_bytes
    w_bytes = int((w1.size + w2.size) * jnp.dtype(w1.dtype).itemsize)
    scratch = b_blk * 2 * (2 * C_out) * tile_n * 4
    needed = 2 * (io_step + w_bytes) + scratch
    vmem_limit = None
    if 2 * needed > 32 * 1024 * 1024:
        vmem_limit = int(min(2 * needed, 48 * 1024 * 1024))

    # Advisory cost estimate (streaming-traffic dominated).
    flops = int(B * HW * (2 * (2 * C_out) * C_in
                          + 2 * (2 * C_out) * (2 * C_out)
                          + 2 * C_out))
    bytes_accessed = int((x3.size + r3.size + B * C_out * HW) * itemsize + w_bytes)
    cost = pl.CostEstimate(flops=flops, transcendentals=0,
                           bytes_accessed=bytes_accessed)

    out3 = pl.pallas_call(
        _sft_kernel,
        out_shape=jax.ShapeDtypeStruct((B, C_out, HW), x.dtype),
        grid_spec=pltpu.PrefetchScalarGridSpec(
            num_scalar_prefetch=0,
            grid=grid,
            in_specs=[
                pl.BlockSpec((b_blk, C_out, tile_n), lambda b, j: (b, 0, j)),  # x
                pl.BlockSpec((b_blk, C_in, tile_n), lambda b, j: (b, 0, j)),   # repr
                pl.BlockSpec((2 * C_out, C_in), lambda b, j: (0, 0)),          # W1
                pl.BlockSpec((2 * C_out, 2 * C_out), lambda b, j: (0, 0)),     # W2
            ],
            out_specs=pl.BlockSpec((b_blk, C_out, tile_n), lambda b, j: (b, 0, j)),
        ),
        compiler_params=pltpu.CompilerParams(
            dimension_semantics=("parallel", "parallel"),
            vmem_limit_bytes=vmem_limit),
        cost_estimate=cost,
    )(x3, r3, w1, w2)

    # Back to NCHW (reshape only; no slicing needed since nothing was padded).
    return out3.reshape(B, C_out, H, W)


def _reference(x, repr_, wg1, wg2, wb1, wb2):
    # Pure-JAX reference of the PyTorch forward (1x1 convs as einsums).
    def conv1x1(inp, w):  # inp: (B,Ci,H,W), w: (Co,Ci)
        return jnp.einsum("bchw,oc->bohw", inp, w)

    gamma = conv1x1(jnp.maximum(conv1x1(repr_, wg1), 0.0), wg2)
    beta = conv1x1(jnp.maximum(conv1x1(repr_, wb1), 0.0), wb2)
    return x * gamma + beta


if __name__ == "__main__":
    key = jax.random.PRNGKey(0)
    k_x, k_r, k_g1, k_g2, k_b1, k_b2 = jax.random.split(key, 6)

    B, C_in, C_out, H, Wd = 2, 8, 4, 16, 16

    x = jax.random.normal(k_x, (B, C_out, H, Wd), dtype=jnp.float32)
    repr_ = jax.random.normal(k_r, (B, C_in, H, Wd), dtype=jnp.float32)

    # Deterministic synthetic Conv2d 1x1 weights (PyTorch shape (out, in, 1, 1),
    # squeezed to (out, in)).
    wg1 = jax.random.normal(k_g1, (C_out, C_in), dtype=jnp.float32) * 0.1
    wg2 = jax.random.normal(k_g2, (C_out, C_out), dtype=jnp.float32) * 0.1
    wb1 = jax.random.normal(k_b1, (C_out, C_in), dtype=jnp.float32) * 0.1
    wb2 = jax.random.normal(k_b2, (C_out, C_out), dtype=jnp.float32) * 0.1

    out = sft_layer(x, repr_, wg1, wg2, wb1, wb2)
    out = jax.block_until_ready(out)

    ref = _reference(x, repr_, wg1, wg2, wb1, wb2)
    assert out.shape == (B, C_out, H, Wd)
    assert jnp.allclose(out, ref, atol=1e-5, rtol=1e-5)

    print("KERNEL_OK")
</pallas_src>

<mosaic_0001>
module attributes {stable_mosaic.version = 11 : i64} {
  func.func @_sft_kernel(%arg0: i32, %arg1: i32, %arg2: memref<1x4x256xf32, #tpu.memory_space<vmem>>, %arg3: memref<1x8x256xf32, #tpu.memory_space<vmem>>, %arg4: memref<8x8xf32, #tpu.memory_space<vmem>>, %arg5: memref<8x8xf32, #tpu.memory_space<vmem>>, %arg6: memref<1x4x256xf32, #tpu.memory_space<vmem>>) attributes {dimension_semantics = [#tpu.dimension_semantics<parallel>, #tpu.dimension_semantics<parallel>], iteration_bounds = array<i64: 2, 1>, scalar_prefetch = 0 : i64, scratch_operands = 0 : i64, tpu.core_type = #tpu.core_type<tc>, window_params = [{transform_indices = @transform_0, window_bounds = array<i64: 1, 4, 256>}, {transform_indices = @transform_1, window_bounds = array<i64: 1, 8, 256>}, {pipeline_mode = #tpu.pipeline_mode<synchronous>, transform_indices = @transform_2, window_bounds = array<i64: 8, 8>}, {pipeline_mode = #tpu.pipeline_mode<synchronous>, transform_indices = @transform_3, window_bounds = array<i64: 8, 8>}, {transform_indices = @transform_4, window_bounds = array<i64: 1, 4, 256>}]} {
    %c0 = arith.constant 0 : index
    %c0_0 = arith.constant 0 : index
    %0 = vector.load %arg4[%c0, %c0_0] : memref<8x8xf32, #tpu.memory_space<vmem>>, vector<8x8xf32>
    %c0_1 = arith.constant 0 : index
    %c0_2 = arith.constant 0 : index
    %1 = vector.load %arg5[%c0_1, %c0_2] : memref<8x8xf32, #tpu.memory_space<vmem>>, vector<8x8xf32>
    %c0_3 = arith.constant 0 : index
    %c0_4 = arith.constant 0 : index
    %c0_5 = arith.constant 0 : index
    %2 = vector.load %arg3[%c0_3, %c0_4, %c0_5] : memref<1x8x256xf32, #tpu.memory_space<vmem>>, vector<1x8x256xf32>
    %3 = vector.shape_cast %2 : vector<1x8x256xf32> to vector<8x256xf32>
    %cst = arith.constant dense<0.000000e+00> : vector<8x256xf32>
    %4 = tpu.matmul %0, %3, %cst {dimension_numbers = #tpu.dot_dimension_numbers<[1], [0], [0], [1], [0, 0, 1, 1], [], []>} : vector<8x8xf32>, vector<8x256xf32>, vector<8x256xf32> -> vector<8x256xf32>
    %cst_6 = arith.constant 0.000000e+00 : f32
    %5 = vector.broadcast %cst_6 : f32 to vector<8x256xf32>
    %6 = arith.maximumf %4, %5 : vector<8x256xf32>
    %cst_7 = arith.constant dense<0.000000e+00> : vector<8x256xf32>
    %7 = tpu.matmul %1, %6, %cst_7 {dimension_numbers = #tpu.dot_dimension_numbers<[1], [0], [0], [1], [0, 0, 1, 1], [], []>} : vector<8x8xf32>, vector<8x256xf32>, vector<8x256xf32> -> vector<8x256xf32>
    %c0_8 = arith.constant 0 : index
    %c0_9 = arith.constant 0 : index
    %c0_10 = arith.constant 0 : index
    %8 = vector.load %arg2[%c0_8, %c0_9, %c0_10] : memref<1x4x256xf32, #tpu.memory_space<vmem>>, vector<1x4x256xf32>
    %9 = vector.shape_cast %8 : vector<1x4x256xf32> to vector<4x256xf32>
    %10 = vector.extract_strided_slice %7 {offsets = [0, 0], sizes = [4, 256], strides = [1, 1]} : vector<8x256xf32> to vector<4x256xf32>
    %11 = arith.mulf %9, %10 : vector<4x256xf32>
    %12 = vector.extract_strided_slice %7 {offsets = [4, 0], sizes = [4, 256], strides = [1, 1]} : vector<8x256xf32> to vector<4x256xf32>
    %13 = arith.addf %11, %12 : vector<4x256xf32>
    %c0_11 = arith.constant 0 : index
    %c0_12 = arith.constant 0 : index
    %c0_13 = arith.constant 0 : index
    %14 = vector.load %arg6[%c0_11, %c0_12, %c0_13] : memref<1x4x256xf32, #tpu.memory_space<vmem>>, vector<1x4x256xf32>
    %15 = vector.shape_cast %14 : vector<1x4x256xf32> to vector<4x256xf32>
    %16 = vector.shape_cast %13 : vector<4x256xf32> to vector<1x4x256xf32>
    tpu.vector_store %arg6[%c0_11, %c0_12, %c0_13], %16 {strides = array<i32>} : memref<1x4x256xf32, #tpu.memory_space<vmem>>, vector<1x4x256xf32>,
    return
  }
  func.func @transform_0(%arg0: i32, %arg1: i32) -> (i32, i32, i32) {
    %c0_i32 = arith.constant 0 : i32
    %c0_i32_0 = arith.constant 0 : i32
    return %arg0, %c0_i32, %arg1 : i32, i32, i32
  }
  func.func @transform_1(%arg0: i32, %arg1: i32) -> (i32, i32, i32) {
    %c0_i32 = arith.constant 0 : i32
    %c0_i32_0 = arith.constant 0 : i32
    return %arg0, %c0_i32, %arg1 : i32, i32, i32
  }
  func.func @transform_2(%arg0: i32, %arg1: i32) -> (i32, i32) {
    %c0_i32 = arith.constant 0 : i32
    %c0_i32_0 = arith.constant 0 : i32
    %c0_i32_1 = arith.constant 0 : i32
    return %c0_i32, %c0_i32_0 : i32, i32
  }
  func.func @transform_3(%arg0: i32, %arg1: i32) -> (i32, i32) {
    %c0_i32 = arith.constant 0 : i32
    %c0_i32_0 = arith.constant 0 : i32
    %c0_i32_1 = arith.constant 0 : i32
    return %c0_i32, %c0_i32_0 : i32, i32
  }
  func.func @transform_4(%arg0: i32, %arg1: i32) -> (i32, i32, i32) {
    %c0_i32 = arith.constant 0 : i32
    %c0_i32_0 = arith.constant 0 : i32
    return %arg0, %c0_i32, %arg1 : i32, i32, i32
  }
}

</mosaic_0001>

<llo_original>
// kernel: tpu_custom_call.1
$region0: #{tpu_custom_call.1}
  #allocation0 [shape = 'u32[]', space=smem, size = 0x4, offset = 0x4, fixed_abs, tag = 'smem constant byte address 0x4 - core index']
  #allocation1 [shape = 'u32[72,128]{1,0:T(1,128)}', space=vmem, size = 0x9000, scoped, tag = 'internal scratch']
  %s0 = inlined_call_operand.hbm [shape: f32[2,4,256], index: 0, kind: input, shape index: {}]
  %s1 = inlined_call_operand.hbm [shape: f32[2,8,256], index: 1, kind: input, shape index: {}]
  %s2 = inlined_call_operand.hbm [shape: f32[8,8], index: 2, kind: input, shape index: {}]
  %s3 = inlined_call_operand.hbm [shape: f32[8,8], index: 3, kind: input, shape index: {}]
  %s4 = inlined_call_operand.hbm [shape: f32[2,4,256], index: 4, kind: output, shape index: {}]
  %s5 = sld [smem:[#allocation0]]
  $region65: #{tpu_custom_call.1} parent=0
    _
  %s7 = ssub.s32 1, %s5
  %s8 = scalar_select 0, %s7, %s5
  $region1: #{tpu_custom_call.1} parent=0
    #allocation2 [shape = 'u8[8192]{0}', space=vmem, size = 0x2000, scoped, tag = 'input window, operand 0']
    #allocation3 [shape = 's32[2]{0}', space=sflag, size = 0x8, scoped, tag = 'scoped memory for tpu_custom_call.1']
    #allocation4 [shape = 's32[2]{0}', space=sflag, size = 0x8, scoped, tag = 'scoped memory for tpu_custom_call.1']
    #allocation5 [shape = 'u8[16384]{0}', space=vmem, size = 0x4000, scoped, tag = 'input window, operand 1']
    #allocation6 [shape = 's32[2]{0}', space=sflag, size = 0x8, scoped, tag = 'scoped memory for tpu_custom_call.1']
    #allocation7 [shape = 'u8[4096]{0}', space=vmem, size = 0x1000, scoped, tag = 'input window, operand 2, single buffered']
    #allocation8 [shape = 'u8[4096]{0}', space=vmem, size = 0x1000, scoped, tag = 'input window, operand 3, single buffered']
    #allocation9 [shape = 's32[1]{0}', space=sflag, size = 0x4, scoped, tag = 'scoped memory for tpu_custom_call.1']
    #allocation10 [shape = 'u8[8192]{0}', space=vmem, size = 0x2000, scoped, tag = 'output window, operand 0']
    %9 = vsyncpa [#allocation3], 0
    %s10 = scalar_lea.sflag [#allocation3], 1
    %11 = vsyncpa %s10, 0
    %12 = vsyncpa [#allocation6], 0
    %s13 = scalar_lea.sflag [#allocation6], 1
    %14 = vsyncpa %s13, 0
    %15 = vsyncpa [#allocation9], 0
    %16 = vsyncpa [#allocation4], 0
    %s17 = scalar_lea.sflag [#allocation4], 1
    %18 = vsyncpa %s17, 0
    loop: start=0, step=1, limit=4
    $region2: #{tpu_custom_call.1} parent=1 // loop_pre_header
      _
    $region3: #{tpu_custom_call.1} parent=1 // loop_header
      %s20 = sphi 0, %s24
      %p21 = scmp.ge.s32.totalorder %s20, 4
      %s27 = sphi 0, %s39
      %s28 = sphi 0, %s35
      %s29 = sphi 0, %s27
      %s30 = sphi 0, %s28
      %s31 = sphi 0, %s29
      %s32 = sphi 0, %s30
      %s44 = sphi 0, %s46
      %s47 = sphi 0, %s44
      %s48 = sphi 0, %s47
      %s64 = sphi 0, %s48
      %s72 = sphi 0, %s74
      %s75 = sphi 0, %s72
      %s76 = sphi 0, %s75
      %s92 = sphi 0, %s76
      %s96 = sphi 0, %s96
      %s98 = sphi 0, %s96
      %s99 = sphi 0, %s98
      %s113 = sphi 0, %s99
      %s117 = sphi 0, %s117
      %s119 = sphi 0, %s117
      %s120 = sphi 0, %s119
      %s134 = sphi 0, %s120
      %s142 = sphi 0, %s144
      %s145 = sphi 0, %s142
      %s146 = sphi 0, %s145
      %s162 = sphi 0, %s146
    $region4: #{tpu_custom_call.1} parent=1 // loop_header_branch
      %23 = sbr.rel (%p21) target = $region8
    $region5: #{tpu_custom_call.1} parent=1 // loop_body
      %s25 = ssub.s32 %s20, 1
      %s26 = ssub.s32 %s20, 2
      %s33 = sadd.s32 1, %s28
      %p34 = scmp.ge.s32.totalorder %s33, 1
      %s35 = scalar_select %p34, 0, %s33
      %s36 = sadd.s32 1, %s27
      %s37 = scalar_select %p34, %s36, %s27
      %p38 = scmp.ge.s32.totalorder %s37, 2
      %s39 = scalar_select %p38, 0, %s37
      %s40 = ssub.s32 %s27, %s39
      %s41 = ssub.s32 %s28, %s35
      %s42 = sor.u32 %s40, %s41
      %p43 = scmp.eq.s32.totalorder %s42, 0
      %s45 = sadd.s32 %s44, 1
      %s46 = scalar_select %p43, %s44, %s45
      %p49 = pneg %p43
      %p50 = scmp.eq.s32.totalorder %s20, 1
      %p51 = por %p49, %p50
      %p52 = scmp.ne.s32.totalorder %s44, %s47
      %p53 = scmp.eq.s32.totalorder %s20, 0
      %p54 = por %p52, %p53
      %p55 = scmp.ne.s32.totalorder %s44, %s47
      %p56 = scmp.eq.s32.totalorder %s25, 1
      %p57 = por %p55, %p56
      %p58 = scmp.ne.s32.totalorder %s47, %s48
      %p59 = scmp.eq.s32.totalorder %s25, 0
      %p60 = por %p58, %p59
      %p61 = scmp.ne.s32.totalorder %s47, %s48
      %p62 = scmp.eq.s32.totalorder %s26, 1
      %p63 = por %p61, %p62
      %p65 = scmp.ne.s32.totalorder %s48, %s64
      %p66 = scmp.eq.s32.totalorder %s26, 0
      %p67 = por %p65, %p66
      %s68 = ssub.s32 %s27, %s39
      %s69 = ssub.s32 %s28, %s35
      %s70 = sor.u32 %s68, %s69
      %p71 = scmp.eq.s32.totalorder %s70, 0
      %s73 = sadd.s32 %s72, 1
      %s74 = scalar_select %p71, %s72, %s73
      %p77 = pneg %p71
      %p78 = scmp.eq.s32.totalorder %s20, 1
      %p79 = por %p77, %p78
      %p80 = scmp.ne.s32.totalorder %s72, %s75
      %p81 = scmp.eq.s32.totalorder %s20, 0
      %p82 = por %p80, %p81
      %p83 = scmp.ne.s32.totalorder %s72, %s75
      %p84 = scmp.eq.s32.totalorder %s25, 1
      %p85 = por %p83, %p84
      %p86 = scmp.ne.s32.totalorder %s75, %s76
      %p87 = scmp.eq.s32.totalorder %s25, 0
      %p88 = por %p86, %p87
      %p89 = scmp.ne.s32.totalorder %s75, %s76
      %p90 = scmp.eq.s32.totalorder %s26, 1
      %p91 = por %p89, %p90
      %p93 = scmp.ne.s32.totalorder %s76, %s92
      %p94 = scmp.eq.s32.totalorder %s26, 0
      %p95 = por %p93, %p94
      %s97 = sadd.s32 %s96, 1
      %p100 = scmp.eq.s32.totalorder %s20, 1
      %p101 = scmp.ne.s32.totalorder %s96, %s98
      %p102 = scmp.eq.s32.totalorder %s20, 0
      %p103 = por %p101, %p102
      %p104 = scmp.ne.s32.totalorder %s96, %s98
      %p105 = scmp.eq.s32.totalorder %s25, 1
      %p106 = por %p104, %p105
      %p107 = scmp.ne.s32.totalorder %s98, %s99
      %p108 = scmp.eq.s32.totalorder %s25, 0
      %p109 = por %p107, %p108
      %p110 = scmp.ne.s32.totalorder %s98, %s99
      %p111 = scmp.eq.s32.totalorder %s26, 1
      %p112 = por %p110, %p111
      %p114 = scmp.ne.s32.totalorder %s99, %s113
      %p115 = scmp.eq.s32.totalorder %s26, 0
      %p116 = por %p114, %p115
      %s118 = sadd.s32 %s117, 1
      %p121 = scmp.eq.s32.totalorder %s20, 1
      %p122 = scmp.ne.s32.totalorder %s117, %s119
      %p123 = scmp.eq.s32.totalorder %s20, 0
      %p124 = por %p122, %p123
      %p125 = scmp.ne.s32.totalorder %s117, %s119
      %p126 = scmp.eq.s32.totalorder %s25, 1
      %p127 = por %p125, %p126
      %p128 = scmp.ne.s32.totalorder %s119, %s120
      %p129 = scmp.eq.s32.totalorder %s25, 0
      %p130 = por %p128, %p129
      %p131 = scmp.ne.s32.totalorder %s119, %s120
      %p132 = scmp.eq.s32.totalorder %s26, 1
      %p133 = por %p131, %p132
      %p135 = scmp.ne.s32.totalorder %s120, %s134
      %p136 = scmp.eq.s32.totalorder %s26, 0
      %p137 = por %p135, %p136
      %s138 = ssub.s32 %s27, %s39
      %s139 = ssub.s32 %s28, %s35
      %s140 = sor.u32 %s138, %s139
      %p141 = scmp.eq.s32.totalorder %s140, 0
      %s143 = sadd.s32 %s142, 1
      %s144 = scalar_select %p141, %s142, %s143
      %p147 = pneg %p141
      %p148 = scmp.eq.s32.totalorder %s20, 1
      %p149 = por %p147, %p148
      %p150 = scmp.ne.s32.totalorder %s142, %s145
      %p151 = scmp.eq.s32.totalorder %s20, 0
      %p152 = por %p150, %p151
      %p153 = scmp.ne.s32.totalorder %s142, %s145
      %p154 = scmp.eq.s32.totalorder %s25, 1
      %p155 = por %p153, %p154
      %p156 = scmp.ne.s32.totalorder %s145, %s146
      %p157 = scmp.eq.s32.totalorder %s25, 0
      %p158 = por %p156, %p157
      %p159 = scmp.ne.s32.totalorder %s145, %s146
      %p160 = scmp.eq.s32.totalorder %s26, 1
      %p161 = por %p159, %p160
      %p163 = scmp.ne.s32.totalorder %s146, %s162
      %p164 = scmp.eq.s32.totalorder %s26, 0
      %p165 = por %p163, %p164
      %p166 = scmp.le.s32.totalorder 1, %s20
      %p167 = scmp.lt.s32.totalorder %s20, 3
      %p168 = pnand %p166, %p167
      %p169 = pneg %p168
      // Predicated region
      $region9: #{tpu_custom_call.1} parent=5 // pred_check
        _
      $region10: #{tpu_custom_call.1} parent=5 // pred_check_branch
        %171 = sbr.rel (%p168) target = $region12
      $region11: #{tpu_custom_call.1} parent=5 // pred_region
        %s172 = ssub.s32 %s20, 1
        // Predicated region
        $region13: #{tpu_custom_call.1} parent=11 // pred_check
          %p173 = pneg %p109
        $region14: #{tpu_custom_call.1} parent=11 // pred_check_branch
          %175 = sbr.rel (%p173) target = $region16
        $region15: #{tpu_custom_call.1} parent=11 // pred_region
          %177 = vsyncadd [#allocation6], 0
          %s179 = sshll.u32 %s2, 4
          %s180 = int_to_ptr.hbm [resolvable:$true] %s179
          %s181 = sshll.u32 [#allocation7], 4
          %s182 = int_to_ptr.vmem [resolvable:$true] %s181
          %184 = dma.hbm_to_vmem [thread:$0]  %s180, 128, %s182, [#allocation6]
        $region16: #{tpu_custom_call.1} parent=11 // pred_fallthru
          _
        // Predicated region
        $region17: #{tpu_custom_call.1} parent=11 // pred_check
          %p185 = pneg %p130
        $region18: #{tpu_custom_call.1} parent=11 // pred_check_branch
          %187 = sbr.rel (%p185) target = $region20
        $region19: #{tpu_custom_call.1} parent=11 // pred_region
          %189 = vsyncadd [#allocation9], 0
          %s191 = sshll.u32 %s3, 4
          %s192 = int_to_ptr.hbm [resolvable:$true] %s191
          %s193 = sshll.u32 [#allocation8], 4
          %s194 = int_to_ptr.vmem [resolvable:$true] %s193
          %196 = dma.hbm_to_vmem [thread:$0]  %s192, 128, %s194, [#allocation9]
        $region20: #{tpu_custom_call.1} parent=11 // pred_fallthru
          _
      $region12: #{tpu_custom_call.1} parent=5 // pred_fallthru
        _
      %p197 = scmp.lt.s32.totalorder %s20, 2
      // Predicated region
      $region21: #{tpu_custom_call.1} parent=5 // pred_check
        %p198 = pneg %p197
      $region22: #{tpu_custom_call.1} parent=5 // pred_check_branch
        %200 = sbr.rel (%p198) target = $region24
      $region23: #{tpu_custom_call.1} parent=5 // pred_region
        // Predicated region
        $region25: #{tpu_custom_call.1} parent=23 // pred_check
          %p201 = pneg %p54
        $region26: #{tpu_custom_call.1} parent=23 // pred_check_branch
          %203 = sbr.rel (%p201) target = $region28
        $region27: #{tpu_custom_call.1} parent=23 // pred_region
          %s204 = sand.u32 %s44, 1
          %s205 = scalar_lea.sflag [#allocation3], %s204
          %s206 = sand.u32 %s44, 1
          %s207 = smul.addr %s206, 8
          %s208 = scalar_lea.vmem [#allocation2], %s207
          %s209 = smul.u32 2, %s28
          %211 = vsyncadd %s205, 0
          %s212 = smul.addr %s27, 2
          %s213 = sadd.s32 %s209, %s212
          %s214 = smul.addr %s213, 4
          %s215 = scalar_lea.hbm %s0, %s214
          %s217 = sshll.u32 %s215, 4
          %s218 = int_to_ptr.hbm [resolvable:$true] %s217
          %s219 = sshll.u32 %s208, 4
          %s220 = int_to_ptr.vmem [resolvable:$true] %s219
          %222 = dma.hbm_to_vmem [thread:$0]  %s218, 128, %s220, %s205
        $region28: #{tpu_custom_call.1} parent=23 // pred_fallthru
          _
        // Predicated region
        $region29: #{tpu_custom_call.1} parent=23 // pred_check
          %p223 = pneg %p82
        $region30: #{tpu_custom_call.1} parent=23 // pred_check_branch
          %225 = sbr.rel (%p223) target = $region32
        $region31: #{tpu_custom_call.1} parent=23 // pred_region
          %s226 = sand.u32 %s20, 1
          %s227 = scalar_lea.sflag [#allocation6], %s226
          %s228 = sand.u32 %s72, 1
          %s229 = smul.addr %s228, 16
          %s230 = scalar_lea.vmem [#allocation5], %s229
          %s231 = smul.u32 2, %s28
          %233 = vsyncadd %s227, 0
          %s234 = smul.addr %s27, 2
          %s235 = sadd.s32 %s231, %s234
          %s236 = smul.addr %s235, 8
          %s237 = scalar_lea.hbm %s1, %s236
          %s239 = sshll.u32 %s237, 4
          %s240 = int_to_ptr.hbm [resolvable:$true] %s239
          %s241 = sshll.u32 %s230, 4
          %s242 = int_to_ptr.vmem [resolvable:$true] %s241
          %244 = dma.hbm_to_vmem [thread:$0]  %s240, 256, %s242, %s227
        $region32: #{tpu_custom_call.1} parent=23 // pred_fallthru
          _
      $region24: #{tpu_custom_call.1} parent=5 // pred_fallthru
        _
      %p245 = scmp.le.s32.totalorder 1, %s20
      %p246 = scmp.lt.s32.totalorder %s20, 3
      %p247 = pnand %p245, %p246
      %p248 = pneg %p247
      // Predicated region
      $region33: #{tpu_custom_call.1} parent=5 // pred_check
        _
      $region34: #{tpu_custom_call.1} parent=5 // pred_check_branch
        %250 = sbr.rel (%p247) target = $region36
      $region35: #{tpu_custom_call.1} parent=5 // pred_region
        %s251 = ssub.s32 %s20, 1
        %s252 = sand.u32 %s47, 1
        %s253 = scalar_lea.sflag [#allocation3], %s252
        %s254 = sand.u32 %s47, 1
        %s255 = smul.addr %s254, 8
        %s256 = scalar_lea.vmem [#allocation2], %s255
        // Predicated region
        $region37: #{tpu_custom_call.1} parent=35 // pred_check
          %p257 = pneg %p60
        $region38: #{tpu_custom_call.1} parent=35 // pred_check_branch
          %259 = sbr.rel (%p257) target = $region40
        $region39: #{tpu_custom_call.1} parent=35 // pred_region
          %261 = dma.done %s253, 128
        $region40: #{tpu_custom_call.1} parent=35 // pred_fallthru
          _
        %s262 = sand.u32 %s25, 1
        %s263 = scalar_lea.sflag [#allocation6], %s262
        %s264 = sand.u32 %s75, 1
        %s265 = smul.addr %s264, 16
        %s266 = scalar_lea.vmem [#allocation5], %s265
        // Predicated region
        $region41: #{tpu_custom_call.1} parent=35 // pred_check
          %p267 = pneg %p88
        $region42: #{tpu_custom_call.1} parent=35 // pred_check_branch
          %269 = sbr.rel (%p267) target = $region44
        $region43: #{tpu_custom_call.1} parent=35 // pred_region
          %271 = dma.done %s263, 256
        $region44: #{tpu_custom_call.1} parent=35 // pred_fallthru
          _
        // Predicated region
        $region45: #{tpu_custom_call.1} parent=35 // pred_check
          %p272 = pneg %p109
        $region46: #{tpu_custom_call.1} parent=35 // pred_check_branch
          %274 = sbr.rel (%p272) target = $region48
        $region47: #{tpu_custom_call.1} parent=35 // pred_region
          %276 = dma.done [#allocation6], 128
        $region48: #{tpu_custom_call.1} parent=35 // pred_fallthru
          _
        // Predicated region
        $region49: #{tpu_custom_call.1} parent=35 // pred_check
          %p277 = pneg %p130
        $region50: #{tpu_custom_call.1} parent=35 // pred_check_branch
          %279 = sbr.rel (%p277) target = $region52
        $region51: #{tpu_custom_call.1} parent=35 // pred_region
          %281 = dma.done [#allocation9], 128
        $region52: #{tpu_custom_call.1} parent=35 // pred_fallthru
          _
        %s282 = sand.u32 %s47, 1
        %s283 = scalar_lea.sflag [#allocation3], %s282
        %s284 = sand.u32 %s47, 1
        %s285 = smul.addr %s284, 8
        %s286 = scalar_lea.vmem [#allocation2], %s285
        %p287 = pneg %p60
        %p288 = pneg %p57
        %s289 = sand.u32 %s25, 1
        %s290 = scalar_lea.sflag [#allocation6], %s289
        %s291 = sand.u32 %s75, 1
        %s292 = smul.addr %s291, 16
        %s293 = scalar_lea.vmem [#allocation5], %s292
        %p294 = pneg %p88
        %p295 = pneg %p85
        %p296 = pneg %p109
        %p297 = pneg %p106
        %p298 = pneg %p130
        %p299 = pneg %p127
        %p300 = pneg %p158
        %p301 = pneg %p155
        %s302 = sand.u32 %s145, 1
        %s303 = scalar_lea.sflag [#allocation4], %s302
        %s304 = sand.u32 %s145, 1
        %s305 = smul.addr %s304, 8
        %s306 = scalar_lea.vmem [#allocation10], %s305
        %s307 = smul.u32 2, %s30
        %s308 = smul.u32 2, %s30
        %s309 = smul.u32 2, %s30
        %v310 = vld [vmem:[#allocation7] sm:$0xff]
        %v311 = vld [vmem:[#allocation8] sm:$0xff]
        %v312 = vld [vmem:[%s266] sm:$0xff]
        %v313 = vld [vmem:[%s266 + $0x8] sm:$0xff]
        %vm314 = vcmask 64512
        %v316 = vsel %vm314, %v310, 0
        %318 = vmatpush.msra.mxu0 0.0
        %319 = vmatpush.msra.mxu0 0.0
        %320 = vmatpush.msra.mxu0 0.0
        %321 = vmatpush.msra.mxu0 0.0
        %322 = vmatpush.msra.mxu0 0.0
        %323 = vmatpush.msra.mxu0 0.0
        %324 = vmatpush.msra.mxu0 0.0
        %325 = vmatpush.msra.mxu0 0.0
        %326 = vmatpush.msra.mxu0 0.0
        %327 = vmatpush.msra.mxu0 0.0
        %328 = vmatpush.msra.mxu0 0.0
        %329 = vmatpush.msra.mxu0 0.0
        %330 = vmatpush.msra.mxu0 0.0
        %331 = vmatpush.msra.mxu0 0.0
        %332 = vmatpush.msra.mxu0 0.0
        %333 = vmatpush.msra.mxu0 %v312
        %334 = vmatmul.f32.gmra.mxu0 %v316
        %v335 = vpop.f32.mrf.mxu0
        %v336 = vadd.f32 0.0, %v335
        %337 = vdwg.mxu0
        %338 = vmatpush.msra.mxu0 0.0
        %339 = vmatpush.msra.mxu0 0.0
        %340 = vmatpush.msra.mxu0 0.0
        %341 = vmatpush.msra.mxu0 0.0
        %342 = vmatpush.msra.mxu0 0.0
        %343 = vmatpush.msra.mxu0 0.0
        %344 = vmatpush.msra.mxu0 0.0
        %345 = vmatpush.msra.mxu0 0.0
        %346 = vmatpush.msra.mxu0 0.0
        %347 = vmatpush.msra.mxu0 0.0
        %348 = vmatpush.msra.mxu0 0.0
        %349 = vmatpush.msra.mxu0 0.0
        %350 = vmatpush.msra.mxu0 0.0
        %351 = vmatpush.msra.mxu0 0.0
        %352 = vmatpush.msra.mxu0 0.0
        %353 = vmatpush.msra.mxu0 %v313
        %354 = vmatmul.f32.gmra.mxu0 %v316
        %v355 = vpop.f32.mrf.mxu0
        %v356 = vadd.f32 0.0, %v355
        %357 = vdwg.mxu0
        %v358 = vmax.f32 %v336, 0.0
        %v359 = vmax.f32 %v356, 0.0
        %v361 = vsel %vm314, %v311, 0
        %363 = vmatpush.msra.mxu0 0.0
        %364 = vmatpush.msra.mxu0 0.0
        %365 = vmatpush.msra.mxu0 0.0
        %366 = vmatpush.msra.mxu0 0.0
        %367 = vmatpush.msra.mxu0 0.0
        %368 = vmatpush.msra.mxu0 0.0
        %369 = vmatpush.msra.mxu0 0.0
        %370 = vmatpush.msra.mxu0 0.0
        %371 = vmatpush.msra.mxu0 0.0
        %372 = vmatpush.msra.mxu0 0.0
        %373 = vmatpush.msra.mxu0 0.0
        %374 = vmatpush.msra.mxu0 0.0
        %375 = vmatpush.msra.mxu0 0.0
        %376 = vmatpush.msra.mxu0 0.0
        %377 = vmatpush.msra.mxu0 0.0
        %378 = vmatpush.msra.mxu0 %v358
        %379 = vmatmul.f32.gmra.mxu0 %v361
        %v380 = vpop.f32.mrf.mxu0
        %v381 = vadd.f32 0.0, %v380
        %382 = vdwg.mxu0
        %383 = vmatpush.msra.mxu0 0.0
        %384 = vmatpush.msra.mxu0 0.0
        %385 = vmatpush.msra.mxu0 0.0
        %386 = vmatpush.msra.mxu0 0.0
        %387 = vmatpush.msra.mxu0 0.0
        %388 = vmatpush.msra.mxu0 0.0
        %389 = vmatpush.msra.mxu0 0.0
        %390 = vmatpush.msra.mxu0 0.0
        %391 = vmatpush.msra.mxu0 0.0
        %392 = vmatpush.msra.mxu0 0.0
        %393 = vmatpush.msra.mxu0 0.0
        %394 = vmatpush.msra.mxu0 0.0
        %395 = vmatpush.msra.mxu0 0.0
        %396 = vmatpush.msra.mxu0 0.0
        %397 = vmatpush.msra.mxu0 0.0
        %398 = vmatpush.msra.mxu0 %v359
        %399 = vmatmul.f32.gmra.mxu0 %v361
        %v400 = vpop.f32.mrf.mxu0
        %v401 = vadd.f32 0.0, %v400
        %402 = vdwg.mxu0
        %v403 = vld [vmem:[%s256] sm:$0xff]
        %v406 = vrot.slane %v401, 4
        %vm407 = vcmask 1043456
        %v408 = vsel %vm407, %v381, %v406
        %v410 = vmul.f32 %v403, %v408
        %411 = vst.sshfl [vmem:[#allocation1] sm:$0xff pattern:$0x75316420] %v381
        %412 = vst.sshfl [vmem:[#allocation1 + $0x8] sm:$0xff pattern:$0x75316420] %v401
        %s413 = scalar_lea.vmem [#allocation1], 1
        %v414 = vld [vmem:[%s413] ss:$2 sm:$0xff]
        %v416 = vadd.f32 %v410, %v414
        %417 = vst [vmem:[%s306] sm:$0xff] %v416
        %s418 = sand.u32 %s145, 1
        %s419 = scalar_lea.sflag [#allocation4], %s418
        %s420 = sand.u32 %s145, 1
        %s421 = smul.addr %s420, 8
        %s422 = scalar_lea.vmem [#allocation10], %s421
        // Predicated region
        $region53: #{tpu_custom_call.1} parent=35 // pred_check
          %p423 = pneg %p155
        $region54: #{tpu_custom_call.1} parent=35 // pred_check_branch
          %425 = sbr.rel (%p423) target = $region56
        $region55: #{tpu_custom_call.1} parent=35 // pred_region
          %s426 = smul.u32 2, %s30
          %428 = vsyncadd %s419, 0
          %s429 = smul.addr %s29, 2
          %s430 = sadd.s32 %s426, %s429
          %s431 = smul.addr %s430, 4
          %s432 = scalar_lea.hbm %s4, %s431
          %s434 = sshll.u32 %s422, 4
          %s435 = int_to_ptr.vmem [resolvable:$true] %s434
          %s436 = sshll.u32 %s432, 4
          %s437 = int_to_ptr.hbm [resolvable:$true] %s436
          %439 = dma.vmem_to_hbm [thread:$0]  %s435, 128, %s437, %s419
        $region56: #{tpu_custom_call.1} parent=35 // pred_fallthru
          _
      $region36: #{tpu_custom_call.1} parent=5 // pred_fallthru
        _
      %p440 = scmp.le.s32.totalorder 2, %s20
      // Predicated region
      $region57: #{tpu_custom_call.1} parent=5 // pred_check
        %p441 = pneg %p440
      $region58: #{tpu_custom_call.1} parent=5 // pred_check_branch
        %443 = sbr.rel (%p441) target = $region60
      $region59: #{tpu_custom_call.1} parent=5 // pred_region
        %s444 = ssub.s32 %s20, 2
        // Predicated region
        $region61: #{tpu_custom_call.1} parent=59 // pred_check
          %p445 = pneg %p161
        $region62: #{tpu_custom_call.1} parent=59 // pred_check_branch
          %447 = sbr.rel (%p445) target = $region64
        $region63: #{tpu_custom_call.1} parent=59 // pred_region
          %s448 = sand.u32 %s146, 1
          %s449 = scalar_lea.sflag [#allocation4], %s448
          %s450 = sand.u32 %s146, 1
          %s451 = smul.addr %s450, 8
          %s452 = scalar_lea.vmem [#allocation10], %s451
          %454 = dma.done %s449, 128
        $region64: #{tpu_custom_call.1} parent=59 // pred_fallthru
          _
      $region60: #{tpu_custom_call.1} parent=5 // pred_fallthru
        _
    $region6: #{tpu_custom_call.1} parent=1 // loop_footer
      %s24 = sadd.s32 1, %s20
    $region7: #{tpu_custom_call.1} parent=1 // loop_footer_branch
      %19 = sbr.rel target = $region3
    $region8: #{tpu_custom_call.1} parent=1 // loop_exit
      _
    %455 = vsyncpa [#allocation3], 1
    %s456 = scalar_lea.sflag [#allocation3], 1
    %457 = vsyncpa %s456, 1
    %458 = vsyncpa [#allocation6], 1
    %s459 = scalar_lea.sflag [#allocation6], 1
    %460 = vsyncpa %s459, 1
    %461 = vsyncpa [#allocation9], 1
    %462 = vsyncpa [#allocation4], 1
    %s463 = scalar_lea.sflag [#allocation4], 1
    %464 = vsyncpa %s463, 1

</llo_original>
